<compile_context>
chip_gen: v7x
topology: tpu7x:2x2x1
jax: 0.10.0
libtpu: 0.0.40
codegen_flags: <defaults>
</compile_context>

<pallas_src>
import jax
import jax.numpy as jnp
from jax.experimental import pallas as pl
from jax.experimental.pallas import tpu as pltpu

_HIDDEN = 20


def _mlp_kernel(params_ref, x_ref, o_ref):
    # params_ref (SMEM, f32[3*HIDDEN + 1]) = [w1(20), b1(20), w2(20), b2(1)]
    x = x_ref[...].astype(jnp.float32)                       # (block_rows, 128)
    acc = jnp.zeros_like(x) + params_ref[3 * _HIDDEN]        # start from b2
    for j in range(_HIDDEN):                                 # fully unrolled VPU loop
        w1_j = params_ref[j]
        b1_j = params_ref[_HIDDEN + j]
        w2_j = params_ref[2 * _HIDDEN + j]
        acc = acc + jnp.maximum(x * w1_j + b1_j, 0.0) * w2_j
    o_ref[...] = acc.astype(o_ref.dtype)


def maximum_likelihood_forward(x, w1, b1, w2, b2, *, block_rows=1024):
    """x: (..., 1). w1: (1,20), b1: (20,)/(1,20), w2: (20,1), b2: (1,)/(1,1)."""
    orig_shape = x.shape
    xf = x.reshape(-1)
    n = xf.shape[0]

    # Lane-dense tiling: rows of 128 lanes; block rows a multiple of 8 (sublane tile).
    rows = pl.cdiv(n, 128)
    rows8 = ((rows + 7) // 8) * 8
    block_rows = max(8, min(block_rows, rows8))              # small N -> one small block
    padded_rows = ((rows8 + block_rows - 1) // block_rows) * block_rows
    grid = (padded_rows // block_rows,)

    xp = jnp.zeros((padded_rows * 128,), xf.dtype).at[:n].set(xf)
    xp = xp.reshape(padded_rows, 128)

    # Pack all parameters into one SMEM-resident f32 vector: [w1, b1, w2, b2].
    params = jnp.concatenate(
        [w1.reshape(-1), b1.reshape(-1), w2.reshape(-1), b2.reshape(-1)]
    ).astype(jnp.float32)

    yp = pl.pallas_call(
        _mlp_kernel,
        out_shape=jax.ShapeDtypeStruct((padded_rows, 128), x.dtype),
        grid_spec=pltpu.PrefetchScalarGridSpec(
            num_scalar_prefetch=1,
            grid=grid,
            in_specs=[pl.BlockSpec((block_rows, 128), lambda i, p: (i, 0))],
            out_specs=pl.BlockSpec((block_rows, 128), lambda i, p: (i, 0)),
        ),
        compiler_params=pltpu.CompilerParams(
            dimension_semantics=("parallel",),
        ),
    )(params, xp)

    return yp.reshape(-1)[:n].reshape(orig_shape)


def init_params(key):
    """Init mirroring nn.Linear defaults: U(-1/sqrt(fan_in), +1/sqrt(fan_in))."""
    k1, k2, k3, k4 = jax.random.split(key, 4)
    bound1 = 1.0 / jnp.sqrt(1.0)    # fan_in = 1
    bound2 = 1.0 / jnp.sqrt(20.0)   # fan_in = 20
    w1 = jax.random.uniform(k1, (1, 20), jnp.float32, -bound1, bound1)
    b1 = jax.random.uniform(k2, (1, 20), jnp.float32, -bound1, bound1)
    w2 = jax.random.uniform(k3, (20, 1), jnp.float32, -bound2, bound2)
    b2 = jax.random.uniform(k4, (1, 1), jnp.float32, -bound2, bound2)
    return w1, b1, w2, b2


if __name__ == "__main__":
    key = jax.random.PRNGKey(0)
    kx, kp = jax.random.split(key)
    batch = 8
    x = jax.random.normal(kx, (batch, 1), jnp.float32)   # module consumes (..., 1)
    w1, b1, w2, b2 = init_params(kp)

    y = maximum_likelihood_forward(x, w1, b1, w2, b2)
    y = jax.block_until_ready(y)

    # Pure-JAX reference (same math as the PyTorch module).
    ref = jnp.maximum(x @ w1 + b1, 0.0) @ w2 + b2
    assert y.shape == (batch, 1)
    assert jnp.allclose(y, ref, atol=1e-5, rtol=1e-5)
    print("KERNEL_OK")
</pallas_src>

<mosaic_0001>
module attributes {stable_mosaic.version = 11 : i64} {
  func.func @_mlp_kernel(%arg0: i32, %arg1: memref<61xf32, #tpu.memory_space<smem>>, %arg2: memref<8x128xf32, #tpu.memory_space<vmem>>, %arg3: memref<8x128xf32, #tpu.memory_space<vmem>>) attributes {dimension_semantics = [#tpu.dimension_semantics<parallel>], iteration_bounds = array<i64: 1>, scalar_prefetch = 1 : i64, scratch_operands = 0 : i64, tpu.core_type = #tpu.core_type<tc>, window_params = [{transform_indices = @transform_0, window_bounds = array<i64: 8, 128>}, {transform_indices = @transform_1, window_bounds = array<i64: 8, 128>}]} {
    %c0 = arith.constant 0 : index
    %c0_0 = arith.constant 0 : index
    %0 = vector.load %arg2[%c0, %c0_0] : memref<8x128xf32, #tpu.memory_space<vmem>>, vector<8x128xf32>
    %cst = arith.constant 0.000000e+00 : f32
    %1 = vector.broadcast %cst : f32 to vector<8x128xf32>
    %c60 = arith.constant 60 : index
    %2 = memref.load %arg1[%c60] : memref<61xf32, #tpu.memory_space<smem>>
    %3 = vector.broadcast %2 : f32 to vector<8x128xf32>
    %4 = arith.addf %1, %3 : vector<8x128xf32>
    %c0_1 = arith.constant 0 : index
    %5 = memref.load %arg1[%c0_1] : memref<61xf32, #tpu.memory_space<smem>>
    %c20 = arith.constant 20 : index
    %6 = memref.load %arg1[%c20] : memref<61xf32, #tpu.memory_space<smem>>
    %c40 = arith.constant 40 : index
    %7 = memref.load %arg1[%c40] : memref<61xf32, #tpu.memory_space<smem>>
    %8 = vector.broadcast %5 : f32 to vector<8x128xf32>
    %9 = arith.mulf %0, %8 : vector<8x128xf32>
    %10 = vector.broadcast %6 : f32 to vector<8x128xf32>
    %11 = arith.addf %9, %10 : vector<8x128xf32>
    %cst_2 = arith.constant 0.000000e+00 : f32
    %12 = vector.broadcast %cst_2 : f32 to vector<8x128xf32>
    %13 = arith.maximumf %11, %12 : vector<8x128xf32>
    %14 = vector.broadcast %7 : f32 to vector<8x128xf32>
    %15 = arith.mulf %13, %14 : vector<8x128xf32>
    %16 = arith.addf %4, %15 : vector<8x128xf32>
    %c1 = arith.constant 1 : index
    %17 = memref.load %arg1[%c1] : memref<61xf32, #tpu.memory_space<smem>>
    %c21 = arith.constant 21 : index
    %18 = memref.load %arg1[%c21] : memref<61xf32, #tpu.memory_space<smem>>
    %c41 = arith.constant 41 : index
    %19 = memref.load %arg1[%c41] : memref<61xf32, #tpu.memory_space<smem>>
    %20 = vector.broadcast %17 : f32 to vector<8x128xf32>
    %21 = arith.mulf %0, %20 : vector<8x128xf32>
    %22 = vector.broadcast %18 : f32 to vector<8x128xf32>
    %23 = arith.addf %21, %22 : vector<8x128xf32>
    %cst_3 = arith.constant 0.000000e+00 : f32
    %24 = vector.broadcast %cst_3 : f32 to vector<8x128xf32>
    %25 = arith.maximumf %23, %24 : vector<8x128xf32>
    %26 = vector.broadcast %19 : f32 to vector<8x128xf32>
    %27 = arith.mulf %25, %26 : vector<8x128xf32>
    %28 = arith.addf %16, %27 : vector<8x128xf32>
    %c2 = arith.constant 2 : index
    %29 = memref.load %arg1[%c2] : memref<61xf32, #tpu.memory_space<smem>>
    %c22 = arith.constant 22 : index
    %30 = memref.load %arg1[%c22] : memref<61xf32, #tpu.memory_space<smem>>
    %c42 = arith.constant 42 : index
    %31 = memref.load %arg1[%c42] : memref<61xf32, #tpu.memory_space<smem>>
    %32 = vector.broadcast %29 : f32 to vector<8x128xf32>
    %33 = arith.mulf %0, %32 : vector<8x128xf32>
    %34 = vector.broadcast %30 : f32 to vector<8x128xf32>
    %35 = arith.addf %33, %34 : vector<8x128xf32>
    %cst_4 = arith.constant 0.000000e+00 : f32
    %36 = vector.broadcast %cst_4 : f32 to vector<8x128xf32>
    %37 = arith.maximumf %35, %36 : vector<8x128xf32>
    %38 = vector.broadcast %31 : f32 to vector<8x128xf32>
    %39 = arith.mulf %37, %38 : vector<8x128xf32>
    %40 = arith.addf %28, %39 : vector<8x128xf32>
    %c3 = arith.constant 3 : index
    %41 = memref.load %arg1[%c3] : memref<61xf32, #tpu.memory_space<smem>>
    %c23 = arith.constant 23 : index
    %42 = memref.load %arg1[%c23] : memref<61xf32, #tpu.memory_space<smem>>
    %c43 = arith.constant 43 : index
    %43 = memref.load %arg1[%c43] : memref<61xf32, #tpu.memory_space<smem>>
    %44 = vector.broadcast %41 : f32 to vector<8x128xf32>
    %45 = arith.mulf %0, %44 : vector<8x128xf32>
    %46 = vector.broadcast %42 : f32 to vector<8x128xf32>
    %47 = arith.addf %45, %46 : vector<8x128xf32>
    %cst_5 = arith.constant 0.000000e+00 : f32
    %48 = vector.broadcast %cst_5 : f32 to vector<8x128xf32>
    %49 = arith.maximumf %47, %48 : vector<8x128xf32>
    %50 = vector.broadcast %43 : f32 to vector<8x128xf32>
    %51 = arith.mulf %49, %50 : vector<8x128xf32>
    %52 = arith.addf %40, %51 : vector<8x128xf32>
    %c4 = arith.constant 4 : index
    %53 = memref.load %arg1[%c4] : memref<61xf32, #tpu.memory_space<smem>>
    %c24 = arith.constant 24 : index
    %54 = memref.load %arg1[%c24] : memref<61xf32, #tpu.memory_space<smem>>
    %c44 = arith.constant 44 : index
    %55 = memref.load %arg1[%c44] : memref<61xf32, #tpu.memory_space<smem>>
    %56 = vector.broadcast %53 : f32 to vector<8x128xf32>
    %57 = arith.mulf %0, %56 : vector<8x128xf32>
    %58 = vector.broadcast %54 : f32 to vector<8x128xf32>
    %59 = arith.addf %57, %58 : vector<8x128xf32>
    %cst_6 = arith.constant 0.000000e+00 : f32
    %60 = vector.broadcast %cst_6 : f32 to vector<8x128xf32>
    %61 = arith.maximumf %59, %60 : vector<8x128xf32>
    %62 = vector.broadcast %55 : f32 to vector<8x128xf32>
    %63 = arith.mulf %61, %62 : vector<8x128xf32>
    %64 = arith.addf %52, %63 : vector<8x128xf32>
    %c5 = arith.constant 5 : index
    %65 = memref.load %arg1[%c5] : memref<61xf32, #tpu.memory_space<smem>>
    %c25 = arith.constant 25 : index
    %66 = memref.load %arg1[%c25] : memref<61xf32, #tpu.memory_space<smem>>
    %c45 = arith.constant 45 : index
    %67 = memref.load %arg1[%c45] : memref<61xf32, #tpu.memory_space<smem>>
    %68 = vector.broadcast %65 : f32 to vector<8x128xf32>
    %69 = arith.mulf %0, %68 : vector<8x128xf32>
    %70 = vector.broadcast %66 : f32 to vector<8x128xf32>
    %71 = arith.addf %69, %70 : vector<8x128xf32>
    %cst_7 = arith.constant 0.000000e+00 : f32
    %72 = vector.broadcast %cst_7 : f32 to vector<8x128xf32>
    %73 = arith.maximumf %71, %72 : vector<8x128xf32>
    %74 = vector.broadcast %67 : f32 to vector<8x128xf32>
    %75 = arith.mulf %73, %74 : vector<8x128xf32>
    %76 = arith.addf %64, %75 : vector<8x128xf32>
    %c6 = arith.constant 6 : index
    %77 = memref.load %arg1[%c6] : memref<61xf32, #tpu.memory_space<smem>>
    %c26 = arith.constant 26 : index
    %78 = memref.load %arg1[%c26] : memref<61xf32, #tpu.memory_space<smem>>
    %c46 = arith.constant 46 : index
    %79 = memref.load %arg1[%c46] : memref<61xf32, #tpu.memory_space<smem>>
    %80 = vector.broadcast %77 : f32 to vector<8x128xf32>
    %81 = arith.mulf %0, %80 : vector<8x128xf32>
    %82 = vector.broadcast %78 : f32 to vector<8x128xf32>
    %83 = arith.addf %81, %82 : vector<8x128xf32>
    %cst_8 = arith.constant 0.000000e+00 : f32
    %84 = vector.broadcast %cst_8 : f32 to vector<8x128xf32>
    %85 = arith.maximumf %83, %84 : vector<8x128xf32>
    %86 = vector.broadcast %79 : f32 to vector<8x128xf32>
    %87 = arith.mulf %85, %86 : vector<8x128xf32>
    %88 = arith.addf %76, %87 : vector<8x128xf32>
    %c7 = arith.constant 7 : index
    %89 = memref.load %arg1[%c7] : memref<61xf32, #tpu.memory_space<smem>>
    %c27 = arith.constant 27 : index
    %90 = memref.load %arg1[%c27] : memref<61xf32, #tpu.memory_space<smem>>
    %c47 = arith.constant 47 : index
    %91 = memref.load %arg1[%c47] : memref<61xf32, #tpu.memory_space<smem>>
    %92 = vector.broadcast %89 : f32 to vector<8x128xf32>
    %93 = arith.mulf %0, %92 : vector<8x128xf32>
    %94 = vector.broadcast %90 : f32 to vector<8x128xf32>
    %95 = arith.addf %93, %94 : vector<8x128xf32>
    %cst_9 = arith.constant 0.000000e+00 : f32
    %96 = vector.broadcast %cst_9 : f32 to vector<8x128xf32>
    %97 = arith.maximumf %95, %96 : vector<8x128xf32>
    %98 = vector.broadcast %91 : f32 to vector<8x128xf32>
    %99 = arith.mulf %97, %98 : vector<8x128xf32>
    %100 = arith.addf %88, %99 : vector<8x128xf32>
    %c8 = arith.constant 8 : index
    %101 = memref.load %arg1[%c8] : memref<61xf32, #tpu.memory_space<smem>>
    %c28 = arith.constant 28 : index
    %102 = memref.load %arg1[%c28] : memref<61xf32, #tpu.memory_space<smem>>
    %c48 = arith.constant 48 : index
    %103 = memref.load %arg1[%c48] : memref<61xf32, #tpu.memory_space<smem>>
    %104 = vector.broadcast %101 : f32 to vector<8x128xf32>
    %105 = arith.mulf %0, %104 : vector<8x128xf32>
    %106 = vector.broadcast %102 : f32 to vector<8x128xf32>
    %107 = arith.addf %105, %106 : vector<8x128xf32>
    %cst_10 = arith.constant 0.000000e+00 : f32
    %108 = vector.broadcast %cst_10 : f32 to vector<8x128xf32>
    %109 = arith.maximumf %107, %108 : vector<8x128xf32>
    %110 = vector.broadcast %103 : f32 to vector<8x128xf32>
    %111 = arith.mulf %109, %110 : vector<8x128xf32>
    %112 = arith.addf %100, %111 : vector<8x128xf32>
    %c9 = arith.constant 9 : index
    %113 = memref.load %arg1[%c9] : memref<61xf32, #tpu.memory_space<smem>>
    %c29 = arith.constant 29 : index
    %114 = memref.load %arg1[%c29] : memref<61xf32, #tpu.memory_space<smem>>
    %c49 = arith.constant 49 : index
    %115 = memref.load %arg1[%c49] : memref<61xf32, #tpu.memory_space<smem>>
    %116 = vector.broadcast %113 : f32 to vector<8x128xf32>
    %117 = arith.mulf %0, %116 : vector<8x128xf32>
    %118 = vector.broadcast %114 : f32 to vector<8x128xf32>
    %119 = arith.addf %117, %118 : vector<8x128xf32>
    %cst_11 = arith.constant 0.000000e+00 : f32
    %120 = vector.broadcast %cst_11 : f32 to vector<8x128xf32>
    %121 = arith.maximumf %119, %120 : vector<8x128xf32>
    %122 = vector.broadcast %115 : f32 to vector<8x128xf32>
    %123 = arith.mulf %121, %122 : vector<8x128xf32>
    %124 = arith.addf %112, %123 : vector<8x128xf32>
    %c10 = arith.constant 10 : index
    %125 = memref.load %arg1[%c10] : memref<61xf32, #tpu.memory_space<smem>>
    %c30 = arith.constant 30 : index
    %126 = memref.load %arg1[%c30] : memref<61xf32, #tpu.memory_space<smem>>
    %c50 = arith.constant 50 : index
    %127 = memref.load %arg1[%c50] : memref<61xf32, #tpu.memory_space<smem>>
    %128 = vector.broadcast %125 : f32 to vector<8x128xf32>
    %129 = arith.mulf %0, %128 : vector<8x128xf32>
    %130 = vector.broadcast %126 : f32 to vector<8x128xf32>
    %131 = arith.addf %129, %130 : vector<8x128xf32>
    %cst_12 = arith.constant 0.000000e+00 : f32
    %132 = vector.broadcast %cst_12 : f32 to vector<8x128xf32>
    %133 = arith.maximumf %131, %132 : vector<8x128xf32>
    %134 = vector.broadcast %127 : f32 to vector<8x128xf32>
    %135 = arith.mulf %133, %134 : vector<8x128xf32>
    %136 = arith.addf %124, %135 : vector<8x128xf32>
    %c11 = arith.constant 11 : index
    %137 = memref.load %arg1[%c11] : memref<61xf32, #tpu.memory_space<smem>>
    %c31 = arith.constant 31 : index
    %138 = memref.load %arg1[%c31] : memref<61xf32, #tpu.memory_space<smem>>
    %c51 = arith.constant 51 : index
    %139 = memref.load %arg1[%c51] : memref<61xf32, #tpu.memory_space<smem>>
    %140 = vector.broadcast %137 : f32 to vector<8x128xf32>
    %141 = arith.mulf %0, %140 : vector<8x128xf32>
    %142 = vector.broadcast %138 : f32 to vector<8x128xf32>
    %143 = arith.addf %141, %142 : vector<8x128xf32>
    %cst_13 = arith.constant 0.000000e+00 : f32
    %144 = vector.broadcast %cst_13 : f32 to vector<8x128xf32>
    %145 = arith.maximumf %143, %144 : vector<8x128xf32>
    %146 = vector.broadcast %139 : f32 to vector<8x128xf32>
    %147 = arith.mulf %145, %146 : vector<8x128xf32>
    %148 = arith.addf %136, %147 : vector<8x128xf32>
    %c12 = arith.constant 12 : index
    %149 = memref.load %arg1[%c12] : memref<61xf32, #tpu.memory_space<smem>>
    %c32 = arith.constant 32 : index
    %150 = memref.load %arg1[%c32] : memref<61xf32, #tpu.memory_space<smem>>
    %c52 = arith.constant 52 : index
    %151 = memref.load %arg1[%c52] : memref<61xf32, #tpu.memory_space<smem>>
    %152 = vector.broadcast %149 : f32 to vector<8x128xf32>
    %153 = arith.mulf %0, %152 : vector<8x128xf32>
    %154 = vector.broadcast %150 : f32 to vector<8x128xf32>
    %155 = arith.addf %153, %154 : vector<8x128xf32>
    %cst_14 = arith.constant 0.000000e+00 : f32
    %156 = vector.broadcast %cst_14 : f32 to vector<8x128xf32>
    %157 = arith.maximumf %155, %156 : vector<8x128xf32>
    %158 = vector.broadcast %151 : f32 to vector<8x128xf32>
    %159 = arith.mulf %157, %158 : vector<8x128xf32>
    %160 = arith.addf %148, %159 : vector<8x128xf32>
    %c13 = arith.constant 13 : index
    %161 = memref.load %arg1[%c13] : memref<61xf32, #tpu.memory_space<smem>>
    %c33 = arith.constant 33 : index
    %162 = memref.load %arg1[%c33] : memref<61xf32, #tpu.memory_space<smem>>
    %c53 = arith.constant 53 : index
    %163 = memref.load %arg1[%c53] : memref<61xf32, #tpu.memory_space<smem>>
    %164 = vector.broadcast %161 : f32 to vector<8x128xf32>
    %165 = arith.mulf %0, %164 : vector<8x128xf32>
    %166 = vector.broadcast %162 : f32 to vector<8x128xf32>
    %167 = arith.addf %165, %166 : vector<8x128xf32>
    %cst_15 = arith.constant 0.000000e+00 : f32
    %168 = vector.broadcast %cst_15 : f32 to vector<8x128xf32>
    %169 = arith.maximumf %167, %168 : vector<8x128xf32>
    %170 = vector.broadcast %163 : f32 to vector<8x128xf32>
    %171 = arith.mulf %169, %170 : vector<8x128xf32>
    %172 = arith.addf %160, %171 : vector<8x128xf32>
    %c14 = arith.constant 14 : index
    %173 = memref.load %arg1[%c14] : memref<61xf32, #tpu.memory_space<smem>>
    %c34 = arith.constant 34 : index
    %174 = memref.load %arg1[%c34] : memref<61xf32, #tpu.memory_space<smem>>
    %c54 = arith.constant 54 : index
    %175 = memref.load %arg1[%c54] : memref<61xf32, #tpu.memory_space<smem>>
    %176 = vector.broadcast %173 : f32 to vector<8x128xf32>
    %177 = arith.mulf %0, %176 : vector<8x128xf32>
    %178 = vector.broadcast %174 : f32 to vector<8x128xf32>
    %179 = arith.addf %177, %178 : vector<8x128xf32>
    %cst_16 = arith.constant 0.000000e+00 : f32
    %180 = vector.broadcast %cst_16 : f32 to vector<8x128xf32>
    %181 = arith.maximumf %179, %180 : vector<8x128xf32>
    %182 = vector.broadcast %175 : f32 to vector<8x128xf32>
    %183 = arith.mulf %181, %182 : vector<8x128xf32>
    %184 = arith.addf %172, %183 : vector<8x128xf32>
    %c15 = arith.constant 15 : index
    %185 = memref.load %arg1[%c15] : memref<61xf32, #tpu.memory_space<smem>>
    %c35 = arith.constant 35 : index
    %186 = memref.load %arg1[%c35] : memref<61xf32, #tpu.memory_space<smem>>
    %c55 = arith.constant 55 : index
    %187 = memref.load %arg1[%c55] : memref<61xf32, #tpu.memory_space<smem>>
    %188 = vector.broadcast %185 : f32 to vector<8x128xf32>
    %189 = arith.mulf %0, %188 : vector<8x128xf32>
    %190 = vector.broadcast %186 : f32 to vector<8x128xf32>
    %191 = arith.addf %189, %190 : vector<8x128xf32>
    %cst_17 = arith.constant 0.000000e+00 : f32
    %192 = vector.broadcast %cst_17 : f32 to vector<8x128xf32>
    %193 = arith.maximumf %191, %192 : vector<8x128xf32>
    %194 = vector.broadcast %187 : f32 to vector<8x128xf32>
    %195 = arith.mulf %193, %194 : vector<8x128xf32>
    %196 = arith.addf %184, %195 : vector<8x128xf32>
    %c16 = arith.constant 16 : index
    %197 = memref.load %arg1[%c16] : memref<61xf32, #tpu.memory_space<smem>>
    %c36 = arith.constant 36 : index
    %198 = memref.load %arg1[%c36] : memref<61xf32, #tpu.memory_space<smem>>
    %c56 = arith.constant 56 : index
    %199 = memref.load %arg1[%c56] : memref<61xf32, #tpu.memory_space<smem>>
    %200 = vector.broadcast %197 : f32 to vector<8x128xf32>
    %201 = arith.mulf %0, %200 : vector<8x128xf32>
    %202 = vector.broadcast %198 : f32 to vector<8x128xf32>
    %203 = arith.addf %201, %202 : vector<8x128xf32>
    %cst_18 = arith.constant 0.000000e+00 : f32
    %204 = vector.broadcast %cst_18 : f32 to vector<8x128xf32>
    %205 = arith.maximumf %203, %204 : vector<8x128xf32>
    %206 = vector.broadcast %199 : f32 to vector<8x128xf32>
    %207 = arith.mulf %205, %206 : vector<8x128xf32>
    %208 = arith.addf %196, %207 : vector<8x128xf32>
    %c17 = arith.constant 17 : index
    %209 = memref.load %arg1[%c17] : memref<61xf32, #tpu.memory_space<smem>>
    %c37 = arith.constant 37 : index
    %210 = memref.load %arg1[%c37] : memref<61xf32, #tpu.memory_space<smem>>
    %c57 = arith.constant 57 : index
    %211 = memref.load %arg1[%c57] : memref<61xf32, #tpu.memory_space<smem>>
    %212 = vector.broadcast %209 : f32 to vector<8x128xf32>
    %213 = arith.mulf %0, %212 : vector<8x128xf32>
    %214 = vector.broadcast %210 : f32 to vector<8x128xf32>
    %215 = arith.addf %213, %214 : vector<8x128xf32>
    %cst_19 = arith.constant 0.000000e+00 : f32
    %216 = vector.broadcast %cst_19 : f32 to vector<8x128xf32>
    %217 = arith.maximumf %215, %216 : vector<8x128xf32>
    %218 = vector.broadcast %211 : f32 to vector<8x128xf32>
    %219 = arith.mulf %217, %218 : vector<8x128xf32>
    %220 = arith.addf %208, %219 : vector<8x128xf32>
    %c18 = arith.constant 18 : index
    %221 = memref.load %arg1[%c18] : memref<61xf32, #tpu.memory_space<smem>>
    %c38 = arith.constant 38 : index
    %222 = memref.load %arg1[%c38] : memref<61xf32, #tpu.memory_space<smem>>
    %c58 = arith.constant 58 : index
    %223 = memref.load %arg1[%c58] : memref<61xf32, #tpu.memory_space<smem>>
    %224 = vector.broadcast %221 : f32 to vector<8x128xf32>
    %225 = arith.mulf %0, %224 : vector<8x128xf32>
    %226 = vector.broadcast %222 : f32 to vector<8x128xf32>
    %227 = arith.addf %225, %226 : vector<8x128xf32>
    %cst_20 = arith.constant 0.000000e+00 : f32
    %228 = vector.broadcast %cst_20 : f32 to vector<8x128xf32>
    %229 = arith.maximumf %227, %228 : vector<8x128xf32>
    %230 = vector.broadcast %223 : f32 to vector<8x128xf32>
    %231 = arith.mulf %229, %230 : vector<8x128xf32>
    %232 = arith.addf %220, %231 : vector<8x128xf32>
    %c19 = arith.constant 19 : index
    %233 = memref.load %arg1[%c19] : memref<61xf32, #tpu.memory_space<smem>>
    %c39 = arith.constant 39 : index
    %234 = memref.load %arg1[%c39] : memref<61xf32, #tpu.memory_space<smem>>
    %c59 = arith.constant 59 : index
    %235 = memref.load %arg1[%c59] : memref<61xf32, #tpu.memory_space<smem>>
    %236 = vector.broadcast %233 : f32 to vector<8x128xf32>
    %237 = arith.mulf %0, %236 : vector<8x128xf32>
    %238 = vector.broadcast %234 : f32 to vector<8x128xf32>
    %239 = arith.addf %237, %238 : vector<8x128xf32>
    %cst_21 = arith.constant 0.000000e+00 : f32
    %240 = vector.broadcast %cst_21 : f32 to vector<8x128xf32>
    %241 = arith.maximumf %239, %240 : vector<8x128xf32>
    %242 = vector.broadcast %235 : f32 to vector<8x128xf32>
    %243 = arith.mulf %241, %242 : vector<8x128xf32>
    %244 = arith.addf %232, %243 : vector<8x128xf32>
    %c0_22 = arith.constant 0 : index
    %c0_23 = arith.constant 0 : index
    %245 = vector.load %arg3[%c0_22, %c0_23] : memref<8x128xf32, #tpu.memory_space<vmem>>, vector<8x128xf32>
    tpu.vector_store %arg3[%c0_22, %c0_23], %244 {strides = array<i32>} : memref<8x128xf32, #tpu.memory_space<vmem>>, vector<8x128xf32>,
    return
  }
  func.func @transform_0(%arg0: i32, %arg1: memref<61xf32, #tpu.memory_space<smem>>) -> (i32, i32) {
    %c0_i32 = arith.constant 0 : i32
    %c0_i32_0 = arith.constant 0 : i32
    return %arg0, %c0_i32 : i32, i32
  }
  func.func @transform_1(%arg0: i32, %arg1: memref<61xf32, #tpu.memory_space<smem>>) -> (i32, i32) {
    %c0_i32 = arith.constant 0 : i32
    %c0_i32_0 = arith.constant 0 : i32
    return %arg0, %c0_i32 : i32, i32
  }
}

</mosaic_0001>

<llo_original>
// kernel: tpu_custom_call.1
$region0: #{tpu_custom_call.1}
  #allocation0 [shape = 'u32[]', space=smem, size = 0x4, offset = 0x4, fixed_abs, tag = 'smem constant byte address 0x4 - core index']
  #allocation1 [shape = 'u32[144,128]{1,0:T(1,128)}', space=vmem, size = 0x12000, scoped, tag = 'internal scratch']
  #allocation2 [shape = 's32[1]{0}', space=sflag, size = 0x4, scoped, tag = 'scoped memory for tpu_custom_call.1']
  #allocation3 [shape = 'u8[512]{0}', space=smem, size = 0x200, scoped, tag = 'prefetched SMEM operand 0']
  %s0 = inlined_call_operand.hbm [shape: f32[61], index: 0, kind: input, shape index: {}]
  %s1 = inlined_call_operand.hbm [shape: f32[8,128], index: 1, kind: input, shape index: {}]
  %s2 = inlined_call_operand.hbm [shape: f32[8,128], index: 2, kind: output, shape index: {}]
  %s3 = sld [smem:[#allocation0]]
  $region18: #{tpu_custom_call.1} parent=0
    _
  %s5 = ssub.s32 1, %s3
  %s6 = scalar_select 0, %s5, %s3
  %8 = dma.hbm_to_smem %s0, 16, [#allocation3], [#allocation2]
  %9 = dma.done [#allocation2], 16
  %10 = sfence
  $region1: #{tpu_custom_call.1} parent=0
    #allocation4 [shape = 'u8[4096]{0}', space=vmem, size = 0x1000, scoped, tag = 'input window, operand 1, single buffered']
    #allocation5 [shape = 's32[1]{0}', space=sflag, size = 0x4, scoped, tag = 'scoped memory for tpu_custom_call.1']
    #allocation6 [shape = 's32[1]{0}', space=sflag, size = 0x4, scoped, tag = 'scoped memory for tpu_custom_call.1']
    #allocation7 [shape = 'u8[4096]{0}', space=vmem, size = 0x1000, scoped, tag = 'output window, operand 0, single buffered']
    %11 = vsyncpa [#allocation5], 0
    %12 = vsyncpa [#allocation6], 0
    // Predicated region
    $region2: #{tpu_custom_call.1} parent=1 // pred_check
      _
    $region3: #{tpu_custom_call.1} parent=1 // pred_check_branch
      %14 = sbr.rel (0) target = $region5
    $region4: #{tpu_custom_call.1} parent=1 // pred_region
      %s16 = ssub.s32 128, 128
      %17 = vsyncadd [#allocation5], %s16
      %s19 = sshll.u32 [#allocation4], 4
      %s20 = int_to_ptr.vmem [resolvable:$true] %s19
      %22 = dma.hbm_to_vmem [thread:$0]  %s1, 128, %s20, [#allocation5]
    $region5: #{tpu_custom_call.1} parent=1 // pred_fallthru
      _
    // Predicated region
    $region6: #{tpu_custom_call.1} parent=1 // pred_check
      _
    $region7: #{tpu_custom_call.1} parent=1 // pred_check_branch
      %24 = sbr.rel (0) target = $region9
    $region8: #{tpu_custom_call.1} parent=1 // pred_region
      %25 = dma.done [#allocation5], 128
    $region9: #{tpu_custom_call.1} parent=1 // pred_fallthru
      _
    %v26 = vld [vmem:[#allocation4] sm:$0xff]
    %s27 = sld [smem:[#allocation3 + $0x3c]]
    %v28 = vstv %s27
    %v29 = vadd.f32 %v28, 0.0
    %s30 = sld [smem:[#allocation3]]
    %s31 = sld [smem:[#allocation3 + $0x14]]
    %s32 = sld [smem:[#allocation3 + $0x28]]
    %v33 = vstv %s30
    %v34 = vmul.f32 %v26, %v33
    %v35 = vstv %s31
    %v36 = vadd.f32 %v34, %v35
    %v37 = vmax.f32 %v36, 0.0
    %v38 = vstv %s32
    %v39 = vmul.f32 %v37, %v38
    %v40 = vadd.f32 %v29, %v39
    %s41 = sld [smem:[#allocation3 + $0x1]]
    %s42 = sld [smem:[#allocation3 + $0x15]]
    %s43 = sld [smem:[#allocation3 + $0x29]]
    %v44 = vstv %s41
    %v45 = vmul.f32 %v26, %v44
    %v46 = vstv %s42
    %v47 = vadd.f32 %v45, %v46
    %v48 = vmax.f32 %v47, 0.0
    %v49 = vstv %s43
    %v50 = vmul.f32 %v48, %v49
    %v51 = vadd.f32 %v40, %v50
    %s52 = sld [smem:[#allocation3 + $0x2]]
    %s53 = sld [smem:[#allocation3 + $0x16]]
    %s54 = sld [smem:[#allocation3 + $0x2a]]
    %v55 = vstv %s52
    %v56 = vmul.f32 %v26, %v55
    %v57 = vstv %s53
    %v58 = vadd.f32 %v56, %v57
    %v59 = vmax.f32 %v58, 0.0
    %v60 = vstv %s54
    %v61 = vmul.f32 %v59, %v60
    %v62 = vadd.f32 %v51, %v61
    %s63 = sld [smem:[#allocation3 + $0x3]]
    %s64 = sld [smem:[#allocation3 + $0x17]]
    %s65 = sld [smem:[#allocation3 + $0x2b]]
    %v66 = vstv %s63
    %v67 = vmul.f32 %v26, %v66
    %v68 = vstv %s64
    %v69 = vadd.f32 %v67, %v68
    %v70 = vmax.f32 %v69, 0.0
    %v71 = vstv %s65
    %v72 = vmul.f32 %v70, %v71
    %v73 = vadd.f32 %v62, %v72
    %s74 = sld [smem:[#allocation3 + $0x4]]
    %s75 = sld [smem:[#allocation3 + $0x18]]
    %s76 = sld [smem:[#allocation3 + $0x2c]]
    %v77 = vstv %s74
    %v78 = vmul.f32 %v26, %v77
    %v79 = vstv %s75
    %v80 = vadd.f32 %v78, %v79
    %v81 = vmax.f32 %v80, 0.0
    %v82 = vstv %s76
    %v83 = vmul.f32 %v81, %v82
    %v84 = vadd.f32 %v73, %v83
    %s85 = sld [smem:[#allocation3 + $0x5]]
    %s86 = sld [smem:[#allocation3 + $0x19]]
    %s87 = sld [smem:[#allocation3 + $0x2d]]
    %v88 = vstv %s85
    %v89 = vmul.f32 %v26, %v88
    %v90 = vstv %s86
    %v91 = vadd.f32 %v89, %v90
    %v92 = vmax.f32 %v91, 0.0
    %v93 = vstv %s87
    %v94 = vmul.f32 %v92, %v93
    %v95 = vadd.f32 %v84, %v94
    %s96 = sld [smem:[#allocation3 + $0x6]]
    %s97 = sld [smem:[#allocation3 + $0x1a]]
    %s98 = sld [smem:[#allocation3 + $0x2e]]
    %v99 = vstv %s96
    %v100 = vmul.f32 %v26, %v99
    %v101 = vstv %s97
    %v102 = vadd.f32 %v100, %v101
    %v103 = vmax.f32 %v102, 0.0
    %v104 = vstv %s98
    %v105 = vmul.f32 %v103, %v104
    %v106 = vadd.f32 %v95, %v105
    %s107 = sld [smem:[#allocation3 + $0x7]]
    %s108 = sld [smem:[#allocation3 + $0x1b]]
    %s109 = sld [smem:[#allocation3 + $0x2f]]
    %v110 = vstv %s107
    %v111 = vmul.f32 %v26, %v110
    %v112 = vstv %s108
    %v113 = vadd.f32 %v111, %v112
    %v114 = vmax.f32 %v113, 0.0
    %v115 = vstv %s109
    %v116 = vmul.f32 %v114, %v115
    %v117 = vadd.f32 %v106, %v116
    %s118 = sld [smem:[#allocation3 + $0x8]]
    %s119 = sld [smem:[#allocation3 + $0x1c]]
    %s120 = sld [smem:[#allocation3 + $0x30]]
    %v121 = vstv %s118
    %v122 = vmul.f32 %v26, %v121
    %v123 = vstv %s119
    %v124 = vadd.f32 %v122, %v123
    %v125 = vmax.f32 %v124, 0.0
    %v126 = vstv %s120
    %v127 = vmul.f32 %v125, %v126
    %v128 = vadd.f32 %v117, %v127
    %s129 = sld [smem:[#allocation3 + $0x9]]
    %s130 = sld [smem:[#allocation3 + $0x1d]]
    %s131 = sld [smem:[#allocation3 + $0x31]]
    %v132 = vstv %s129
    %v133 = vmul.f32 %v26, %v132
    %v134 = vstv %s130
    %v135 = vadd.f32 %v133, %v134
    %v136 = vmax.f32 %v135, 0.0
    %v137 = vstv %s131
    %v138 = vmul.f32 %v136, %v137
    %v139 = vadd.f32 %v128, %v138
    %s140 = sld [smem:[#allocation3 + $0xa]]
    %s141 = sld [smem:[#allocation3 + $0x1e]]
    %s142 = sld [smem:[#allocation3 + $0x32]]
    %v143 = vstv %s140
    %v144 = vmul.f32 %v26, %v143
    %v145 = vstv %s141
    %v146 = vadd.f32 %v144, %v145
    %v147 = vmax.f32 %v146, 0.0
    %v148 = vstv %s142
    %v149 = vmul.f32 %v147, %v148
    %v150 = vadd.f32 %v139, %v149
    %s151 = sld [smem:[#allocation3 + $0xb]]
    %s152 = sld [smem:[#allocation3 + $0x1f]]
    %s153 = sld [smem:[#allocation3 + $0x33]]
    %v154 = vstv %s151
    %v155 = vmul.f32 %v26, %v154
    %v156 = vstv %s152
    %v157 = vadd.f32 %v155, %v156
    %v158 = vmax.f32 %v157, 0.0
    %v159 = vstv %s153
    %v160 = vmul.f32 %v158, %v159
    %v161 = vadd.f32 %v150, %v160
    %s162 = sld [smem:[#allocation3 + $0xc]]
    %s163 = sld [smem:[#allocation3 + $0x20]]
    %s164 = sld [smem:[#allocation3 + $0x34]]
    %v165 = vstv %s162
    %v166 = vmul.f32 %v26, %v165
    %v167 = vstv %s163
    %v168 = vadd.f32 %v166, %v167
    %v169 = vmax.f32 %v168, 0.0
    %v170 = vstv %s164
    %v171 = vmul.f32 %v169, %v170
    %v172 = vadd.f32 %v161, %v171
    %s173 = sld [smem:[#allocation3 + $0xd]]
    %s174 = sld [smem:[#allocation3 + $0x21]]
    %s175 = sld [smem:[#allocation3 + $0x35]]
    %v176 = vstv %s173
    %v177 = vmul.f32 %v26, %v176
    %v178 = vstv %s174
    %v179 = vadd.f32 %v177, %v178
    %v180 = vmax.f32 %v179, 0.0
    %v181 = vstv %s175
    %v182 = vmul.f32 %v180, %v181
    %v183 = vadd.f32 %v172, %v182
    %s184 = sld [smem:[#allocation3 + $0xe]]
    %s185 = sld [smem:[#allocation3 + $0x22]]
    %s186 = sld [smem:[#allocation3 + $0x36]]
    %v187 = vstv %s184
    %v188 = vmul.f32 %v26, %v187
    %v189 = vstv %s185
    %v190 = vadd.f32 %v188, %v189
    %v191 = vmax.f32 %v190, 0.0
    %v192 = vstv %s186
    %v193 = vmul.f32 %v191, %v192
    %v194 = vadd.f32 %v183, %v193
    %s195 = sld [smem:[#allocation3 + $0xf]]
    %s196 = sld [smem:[#allocation3 + $0x23]]
    %s197 = sld [smem:[#allocation3 + $0x37]]
    %v198 = vstv %s195
    %v199 = vmul.f32 %v26, %v198
    %v200 = vstv %s196
    %v201 = vadd.f32 %v199, %v200
    %v202 = vmax.f32 %v201, 0.0
    %v203 = vstv %s197
    %v204 = vmul.f32 %v202, %v203
    %v205 = vadd.f32 %v194, %v204
    %s206 = sld [smem:[#allocation3 + $0x10]]
    %s207 = sld [smem:[#allocation3 + $0x24]]
    %s208 = sld [smem:[#allocation3 + $0x38]]
    %v209 = vstv %s206
    %v210 = vmul.f32 %v26, %v209
    %v211 = vstv %s207
    %v212 = vadd.f32 %v210, %v211
    %v213 = vmax.f32 %v212, 0.0
    %v214 = vstv %s208
    %v215 = vmul.f32 %v213, %v214
    %v216 = vadd.f32 %v205, %v215
    %s217 = sld [smem:[#allocation3 + $0x11]]
    %s218 = sld [smem:[#allocation3 + $0x25]]
    %s219 = sld [smem:[#allocation3 + $0x39]]
    %v220 = vstv %s217
    %v221 = vmul.f32 %v26, %v220
    %v222 = vstv %s218
    %v223 = vadd.f32 %v221, %v222
    %v224 = vmax.f32 %v223, 0.0
    %v225 = vstv %s219
    %v226 = vmul.f32 %v224, %v225
    %v227 = vadd.f32 %v216, %v226
    %s228 = sld [smem:[#allocation3 + $0x12]]
    %s229 = sld [smem:[#allocation3 + $0x26]]
    %s230 = sld [smem:[#allocation3 + $0x3a]]
    %v231 = vstv %s228
    %v232 = vmul.f32 %v26, %v231
    %v233 = vstv %s229
    %v234 = vadd.f32 %v232, %v233
    %v235 = vmax.f32 %v234, 0.0
    %v236 = vstv %s230
    %v237 = vmul.f32 %v235, %v236
    %v238 = vadd.f32 %v227, %v237
    %s239 = sld [smem:[#allocation3 + $0x13]]
    %s240 = sld [smem:[#allocation3 + $0x27]]
    %s241 = sld [smem:[#allocation3 + $0x3b]]
    %v242 = vstv %s239
    %v243 = vmul.f32 %v26, %v242
    %v244 = vstv %s240
    %v245 = vadd.f32 %v243, %v244
    %v246 = vmax.f32 %v245, 0.0
    %v247 = vstv %s241
    %v248 = vmul.f32 %v246, %v247
    %v249 = vadd.f32 %v238, %v248
    %250 = vst [vmem:[#allocation7] sm:$0xff] %v249
    // Predicated region
    $region10: #{tpu_custom_call.1} parent=1 // pred_check
      _
    $region11: #{tpu_custom_call.1} parent=1 // pred_check_branch
      %252 = sbr.rel (0) target = $region13
    $region12: #{tpu_custom_call.1} parent=1 // pred_region
      %s254 = ssub.s32 128, 128
      %255 = vsyncadd [#allocation6], %s254
      %s257 = sshll.u32 [#allocation7], 4
      %s258 = int_to_ptr.vmem [resolvable:$true] %s257
      %260 = dma.vmem_to_hbm [thread:$0]  %s258, 128, %s2, [#allocation6]
    $region13: #{tpu_custom_call.1} parent=1 // pred_fallthru
      _
    // Predicated region
    $region14: #{tpu_custom_call.1} parent=1 // pred_check
      _
    $region15: #{tpu_custom_call.1} parent=1 // pred_check_branch
      %262 = sbr.rel (0) target = $region17
    $region16: #{tpu_custom_call.1} parent=1 // pred_region
      %263 = dma.done [#allocation6], 128
    $region17: #{tpu_custom_call.1} parent=1 // pred_fallthru
      _
    %264 = vsyncpa [#allocation5], 1
    %265 = vsyncpa [#allocation6], 1

</llo_original>
